<compile_context>
chip_gen: v7x
topology: tpu7x:2x2x1
jax: 0.10.0
libtpu: 0.0.40
codegen_flags: <defaults>
</compile_context>

<pallas_src>
import jax
import jax.numpy as jnp
from jax.experimental import pallas as pl
from jax.experimental.pallas import tpu as pltpu


def _round_up(a: int, m: int) -> int:
    return ((a + m - 1) // m) * m


def linear_1x1_kernel(x_ref, wb_ref, o_ref):
    # x_ref: (tile_rows, lane_width) VMEM tile of the lane-dense activation slab.
    # wb_ref: (2,) SMEM -> [weight, bias] of the 1x1 Linear.
    # y = x * W[0,0] + b[0]   (exactly x @ W.T + b for a 1x1 Linear)
    o_ref[...] = x_ref[...] * wb_ref[0] + wb_ref[1]


def net_forward(x, w, b, *, tile_rows=512, lane_width=512):
    """Pallas equivalent of Net.forward (torch.nn.Linear(1, 1)).

    x: (N, 1) float32. Returns (N, 1).
    The activation is reshaped/padded to a lane-dense (rows, lane_width) slab
    and streamed through a 1-D parallel grid of (tile_rows, lane_width) tiles.
    """
    n, f = x.shape
    assert f == 1, "Net uses Linear(1, 1); expected last dim == 1"
    dtype = x.dtype
    total = n * f

    # Lane-dense slab: last dim is a multiple of 128 (here `lane_width`).
    rows = pl.cdiv(total, lane_width)
    tile_rows = min(tile_rows, _round_up(rows, 8))  # shrink tiles for tiny N
    rows_p = _round_up(rows, tile_rows)
    padded = rows_p * lane_width

    xf = x.reshape(-1)
    if padded != total:
        xf = jnp.pad(xf, (0, padded - total))
    x2 = xf.reshape(rows_p, lane_width)

    # Pack the two scalar parameters into one small SMEM operand.
    wb = jnp.concatenate([w.reshape(1), b.reshape(1)]).astype(dtype)

    grid = (rows_p // tile_rows,)
    y2 = pl.pallas_call(
        linear_1x1_kernel,
        out_shape=jax.ShapeDtypeStruct((rows_p, lane_width), dtype),
        grid=grid,
        in_specs=[
            pl.BlockSpec((tile_rows, lane_width), lambda i: (i, 0)),
            pl.BlockSpec(memory_space=pltpu.MemorySpace.SMEM),
        ],
        out_specs=pl.BlockSpec((tile_rows, lane_width), lambda i: (i, 0)),
        compiler_params=pltpu.CompilerParams(
            dimension_semantics=("parallel",)),
    )(x2, wb)

    return y2.reshape(-1)[:total].reshape(n, f)


if __name__ == "__main__":
    key = jax.random.PRNGKey(0)
    kx, kw, kb, kx2 = jax.random.split(key, 4)

    # Deterministic parameter init (mimics torch's U(-1, 1) bound for fan_in=1).
    w = jax.random.uniform(kw, (1, 1), dtype=jnp.float32, minval=-1.0, maxval=1.0)
    b = jax.random.uniform(kb, (1,), dtype=jnp.float32, minval=-1.0, maxval=1.0)

    # Case 1: small batch of 8 scalars (single grid step, tiles auto-shrunk).
    x_small = jax.random.normal(kx, (8, 1), dtype=jnp.float32)
    y_small = net_forward(x_small, w, b)
    jax.block_until_ready(y_small)
    y_small_ref = x_small @ w.T + b
    assert y_small.shape == (8, 1)
    assert jnp.allclose(y_small, y_small_ref, atol=1e-6), "mismatch vs reference (N=8)"

    # Case 2: larger batch with small tiles to exercise the multi-step parallel grid.
    x_big = jax.random.normal(kx2, (4096, 1), dtype=jnp.float32)
    y_big = net_forward(x_big, w, b, tile_rows=8, lane_width=128)
    jax.block_until_ready(y_big)
    y_big_ref = x_big @ w.T + b
    assert y_big.shape == (4096, 1)
    assert jnp.allclose(y_big, y_big_ref, atol=1e-6), "mismatch vs reference (N=4096)"

    print("KERNEL_OK")
</pallas_src>

<mosaic_0001>
module attributes {stable_mosaic.version = 11 : i64} {
  func.func @linear_1x1_kernel(%arg0: i32, %arg1: memref<8x512xf32, #tpu.memory_space<vmem>>, %arg2: memref<2xf32, #tpu.memory_space<smem>>, %arg3: memref<8x512xf32, #tpu.memory_space<vmem>>) attributes {dimension_semantics = [#tpu.dimension_semantics<parallel>], iteration_bounds = array<i64: 1>, scalar_prefetch = 0 : i64, scratch_operands = 0 : i64, tpu.core_type = #tpu.core_type<tc>, window_params = [{transform_indices = @transform_0, window_bounds = array<i64: 8, 512>}, {transform_indices = @transform_1, window_bounds = array<i64: 2>}, {transform_indices = @transform_2, window_bounds = array<i64: 8, 512>}]} {
    %c0 = arith.constant 0 : index
    %c0_0 = arith.constant 0 : index
    %0 = vector.load %arg1[%c0, %c0_0] : memref<8x512xf32, #tpu.memory_space<vmem>>, vector<8x512xf32>
    %c0_1 = arith.constant 0 : index
    %1 = memref.load %arg2[%c0_1] : memref<2xf32, #tpu.memory_space<smem>>
    %2 = vector.broadcast %1 : f32 to vector<8x512xf32>
    %3 = arith.mulf %0, %2 : vector<8x512xf32>
    %c1 = arith.constant 1 : index
    %4 = memref.load %arg2[%c1] : memref<2xf32, #tpu.memory_space<smem>>
    %5 = vector.broadcast %4 : f32 to vector<8x512xf32>
    %6 = arith.addf %3, %5 : vector<8x512xf32>
    %c0_2 = arith.constant 0 : index
    %c0_3 = arith.constant 0 : index
    %7 = vector.load %arg3[%c0_2, %c0_3] : memref<8x512xf32, #tpu.memory_space<vmem>>, vector<8x512xf32>
    tpu.vector_store %arg3[%c0_2, %c0_3], %6 {strides = array<i32>} : memref<8x512xf32, #tpu.memory_space<vmem>>, vector<8x512xf32>,
    return
  }
  func.func @transform_0(%arg0: i32) -> (i32, i32) {
    %c0_i32 = arith.constant 0 : i32
    %c0_i32_0 = arith.constant 0 : i32
    return %arg0, %c0_i32 : i32, i32
  }
  func.func @transform_1(%arg0: i32) -> i32 {
    %c0_i32 = arith.constant 0 : i32
    %c0_i32_0 = arith.constant 0 : i32
    return %c0_i32 : i32
  }
  func.func @transform_2(%arg0: i32) -> (i32, i32) {
    %c0_i32 = arith.constant 0 : i32
    %c0_i32_0 = arith.constant 0 : i32
    return %arg0, %c0_i32 : i32, i32
  }
}

</mosaic_0001>

<llo_original>
// kernel: tpu_custom_call.1
$region0: #{tpu_custom_call.1}
  #allocation0 [shape = 'u32[]', space=smem, size = 0x4, offset = 0x4, fixed_abs, tag = 'smem constant byte address 0x4 - core index']
  #allocation1 [shape = 'u32[144,128]{1,0:T(1,128)}', space=vmem, size = 0x12000, scoped, tag = 'internal scratch']
  %s0 = inlined_call_operand.hbm [shape: f32[8,512], index: 0, kind: input, shape index: {}]
  %s1 = inlined_call_operand.vmem [shape: f32[2], index: 1, kind: input, shape index: {}]
  %s2 = inlined_call_operand.hbm [shape: f32[8,512], index: 2, kind: output, shape index: {}]
  %s3 = sld [smem:[#allocation0]]
  $region26: #{tpu_custom_call.1} parent=0
    _
  %s5 = ssub.s32 1, %s3
  %s6 = scalar_select 0, %s5, %s3
  $region1: #{tpu_custom_call.1} parent=0
    #allocation2 [shape = 'u8[16384]{0}', space=vmem, size = 0x4000, scoped, tag = 'input window, operand 0, single buffered']
    #allocation3 [shape = 's32[1]{0}', space=sflag, size = 0x4, scoped, tag = 'scoped memory for tpu_custom_call.1']
    #allocation4 [shape = 's32[1]{0}', space=sflag, size = 0x4, scoped, tag = 'scoped memory for tpu_custom_call.1']
    #allocation5 [shape = 's32[1]{0}', space=sflag, size = 0x4, scoped, tag = 'scoped memory for tpu_custom_call.1']
    #allocation6 [shape = 'u8[512]{0}', space=smem, size = 0x200, scoped, tag = 'input window, operand 1, single buffered']
    #allocation7 [shape = 'u8[16384]{0}', space=vmem, size = 0x4000, scoped, tag = 'output window, operand 0, single buffered']
    %7 = vsyncpa [#allocation3], 0
    %8 = vsyncpa [#allocation5], 0
    %9 = vsyncpa [#allocation4], 0
    // Predicated region
    $region2: #{tpu_custom_call.1} parent=1 // pred_check
      _
    $region3: #{tpu_custom_call.1} parent=1 // pred_check_branch
      %11 = sbr.rel (0) target = $region5
    $region4: #{tpu_custom_call.1} parent=1 // pred_region
      %s13 = ssub.s32 512, 512
      %14 = vsyncadd [#allocation3], %s13
      %s16 = sshll.u32 [#allocation2], 4
      %s17 = int_to_ptr.vmem [resolvable:$true] %s16
      %19 = dma.hbm_to_vmem [thread:$0]  %s0, 512, %s17, [#allocation3]
    $region5: #{tpu_custom_call.1} parent=1 // pred_fallthru
      _
    // Predicated region
    $region6: #{tpu_custom_call.1} parent=1 // pred_check
      _
    $region7: #{tpu_custom_call.1} parent=1 // pred_check_branch
      %21 = sbr.rel (0) target = $region9
    $region8: #{tpu_custom_call.1} parent=1 // pred_region
      %s23 = ssub.s32 16, 16
      %24 = vsyncadd [#allocation5], %s23
      %s26 = sshll.u32 %s1, 4
      %s27 = int_to_ptr.vmem [resolvable:$true] %s26
      %29 = dma.vmem_to_smem %s27, 16, [#allocation6], [#allocation5]
    $region9: #{tpu_custom_call.1} parent=1 // pred_fallthru
      _
    // Predicated region
    $region10: #{tpu_custom_call.1} parent=1 // pred_check
      _
    $region11: #{tpu_custom_call.1} parent=1 // pred_check_branch
      %31 = sbr.rel (0) target = $region13
    $region12: #{tpu_custom_call.1} parent=1 // pred_region
      %32 = dma.done [#allocation3], 512
    $region13: #{tpu_custom_call.1} parent=1 // pred_fallthru
      _
    // Predicated region
    $region14: #{tpu_custom_call.1} parent=1 // pred_check
      _
    $region15: #{tpu_custom_call.1} parent=1 // pred_check_branch
      %34 = sbr.rel (0) target = $region17
    $region16: #{tpu_custom_call.1} parent=1 // pred_region
      %35 = dma.done [#allocation5], 16
    $region17: #{tpu_custom_call.1} parent=1 // pred_fallthru
      _
    %36 = sfence
    %v37 = vld [vmem:[#allocation2] sm:$0xff]
    %v38 = vld [vmem:[#allocation2 + $0x8] sm:$0xff]
    %v39 = vld [vmem:[#allocation2 + $0x10] sm:$0xff]
    %v40 = vld [vmem:[#allocation2 + $0x18] sm:$0xff]
    %s41 = sld [smem:[#allocation6]]
    %v42 = vstv %s41
    %v43 = vmul.f32 %v37, %v42
    %v44 = vmul.f32 %v38, %v42
    %v45 = vmul.f32 %v39, %v42
    %v46 = vmul.f32 %v40, %v42
    %s47 = sld [smem:[#allocation6 + $0x1]]
    %v48 = vstv %s47
    %v49 = vadd.f32 %v43, %v48
    %v50 = vadd.f32 %v44, %v48
    %v51 = vadd.f32 %v45, %v48
    %v52 = vadd.f32 %v46, %v48
    %53 = vst [vmem:[#allocation7] sm:$0xff] %v49
    %54 = vst [vmem:[#allocation7 + $0x8] sm:$0xff] %v50
    %55 = vst [vmem:[#allocation7 + $0x10] sm:$0xff] %v51
    %56 = vst [vmem:[#allocation7 + $0x18] sm:$0xff] %v52
    // Predicated region
    $region18: #{tpu_custom_call.1} parent=1 // pred_check
      _
    $region19: #{tpu_custom_call.1} parent=1 // pred_check_branch
      %58 = sbr.rel (0) target = $region21
    $region20: #{tpu_custom_call.1} parent=1 // pred_region
      %s60 = ssub.s32 512, 512
      %61 = vsyncadd [#allocation4], %s60
      %s63 = sshll.u32 [#allocation7], 4
      %s64 = int_to_ptr.vmem [resolvable:$true] %s63
      %66 = dma.vmem_to_hbm [thread:$0]  %s64, 512, %s2, [#allocation4]
    $region21: #{tpu_custom_call.1} parent=1 // pred_fallthru
      _
    // Predicated region
    $region22: #{tpu_custom_call.1} parent=1 // pred_check
      _
    $region23: #{tpu_custom_call.1} parent=1 // pred_check_branch
      %68 = sbr.rel (0) target = $region25
    $region24: #{tpu_custom_call.1} parent=1 // pred_region
      %69 = dma.done [#allocation4], 512
    $region25: #{tpu_custom_call.1} parent=1 // pred_fallthru
      _
    %70 = vsyncpa [#allocation3], 1
    %71 = vsyncpa [#allocation4], 1
    %72 = vsyncpa [#allocation5], 1

</llo_original>
